<compile_context>
chip_gen: v7x
topology: tpu7x:2x2x1
jax: 0.10.0
libtpu: 0.0.40
codegen_flags: <defaults>
</compile_context>

<pallas_src>
import math

import jax
import jax.numpy as jnp
from jax.experimental import pallas as pl
from jax.experimental.pallas import tpu as pltpu


def tim_kernel(w_ref, x_ref, o_ref):
    # w_ref: (3, TC, 1|THW) f32 depthwise taps; x_ref / o_ref: (T, TC, THW).
    t = x_ref.shape[0]
    w = w_ref[...]
    w0, w1, w2 = w[0], w[1], w[2]      # taps on x[t-1], x[t], x[t+1]
    x = x_ref[...]                     # one load of the whole tile
    odt = o_ref.dtype

    if t == 1:
        o_ref[0] = (w1 * x[0]).astype(odt)
        return

    # First frame: the left tap is implicitly zero-padded.
    o_ref[0] = (w1 * x[0] + w2 * x[1]).astype(odt)
    if t > 2:
        # Interior frames: full 3-tap FMA, single store per output element.
        o_ref[pl.ds(1, t - 2), :, :] = (
            w0 * x[: t - 2] + w1 * x[1 : t - 1] + w2 * x[2:]
        ).astype(odt)
    # Last frame: the right tap is implicitly zero-padded.
    o_ref[t - 1] = (w0 * x[t - 2] + w1 * x[t - 1]).astype(odt)


def _pick_tile(total, align, max_tile):
    """Largest divisor of `total` that is a multiple of `align` and <= max_tile.

    Falls back to the full extent (always a legal block dim) when no such
    divisor exists.
    """
    if total % align == 0:
        best = None
        limit = min(total, max(align, max_tile))
        d = align
        while d <= limit:
            if total % d == 0:
                best = d
            d += align
        if best is not None:
            return best
    return total


def _default_vmem_limit_bytes():
    cap = 64 << 20  # conservative fallback (v7x physical VMEM per TC)
    try:
        info = pltpu.get_tpu_info()
        cap = int(getattr(info, "vmem_capacity_bytes", cap))
    except Exception:
        pass
    # Leave headroom for Mosaic internal scratch; never ask for more than 64 MiB.
    return int(min(max(cap - (16 << 20), 16 << 20), 64 << 20))


def _choose_tiles(t, c_g, lane, itemsize, align_c, budget):
    """Pick (tc, thw): prefer full-lane (contiguous DMA) blocks and split
    channels first; split the lane axis only as a last resort."""
    thw = lane
    max_tc = max(align_c, budget // max(1, itemsize * t * lane))
    tc = _pick_tile(c_g, align_c, max_tc)
    if itemsize * t * tc * thw > budget:
        tc = _pick_tile(c_g, align_c, align_c)
        max_thw = max(128, budget // max(1, itemsize * t * tc))
        thw = _pick_tile(lane, 128, max_thw)
    return tc, thw


def tim_forward(x, weight, n_segment, *, tile_c=None, tile_hw=None,
                block_budget_bytes=None, vmem_limit_bytes=None):
    """x: (nt, C, H, W); weight: (C, 1, 3) torch depthwise Conv1d layout."""
    nt, c, h, w = x.shape
    assert nt % n_segment == 0
    n_batch = nt // n_segment
    hw = h * w
    itemsize = jnp.dtype(x.dtype).itemsize
    # Sublane alignment of the channel tile is dtype-dependent (packing tile).
    align_c = max(8, 32 // itemsize)

    # Lane-density regroup: fold g consecutive channels into the lane axis so
    # the minor dim is a multiple of 128 (unmasked vst + dense DMA) even for
    # spatial sizes like 7x7 / 14x14 / 28x28 / 56x56.
    g = 1
    if hw % 128 != 0:
        gg = 128 // math.gcd(hw, 128)
        if c % gg == 0:
            g = gg
        # TODO(synk): pad HW to the next 128 multiple when C % g != 0.
    c_g = c // g
    lane = g * hw

    xr = x.reshape(n_batch, n_segment, c_g, lane)

    vmem_limit = (vmem_limit_bytes if vmem_limit_bytes is not None
                  else _default_vmem_limit_bytes())
    budget = (block_budget_bytes if block_budget_bytes is not None
              else max(1 << 20, vmem_limit // 10))

    if tile_c is not None or tile_hw is not None:
        tc = tile_c if tile_c is not None else c_g
        thw = tile_hw if tile_hw is not None else lane
    else:
        tc, thw = _choose_tiles(n_segment, c_g, lane, itemsize, align_c, budget)
        # v7x megacore: guarantee >= 2 grid steps so both TensorCores get work.
        if n_batch * (c_g // tc) * (lane // thw) < 2:
            tc2 = _pick_tile(c_g, align_c, max(align_c, c_g // 2))
            if 0 < tc2 < c_g:
                tc = tc2

    grid = (c_g // tc, lane // thw, n_batch)

    # Depthwise taps, f32, tap-major: (C, 1, 3) -> (3, C).
    w2d = jnp.transpose(weight.astype(jnp.float32)[:, 0, :], (1, 0))
    if g > 1:
        # Expand per lane so the regrouped broadcast still matches channels.
        w_arr = jnp.broadcast_to(w2d[:, :, None], (3, c, hw)).reshape(3, c_g, lane)
        w_spec = pl.BlockSpec((3, tc, thw), lambda ci, si, b: (0, ci, si))
    else:
        w_arr = w2d[:, :, None]                       # (3, C, 1), lane-broadcast
        w_spec = pl.BlockSpec((3, tc, 1), lambda ci, si, b: (0, ci, 0))

    x_spec = pl.BlockSpec((pl.Squeezed(), n_segment, tc, thw),
                          lambda ci, si, b: (b, 0, ci, si))
    o_spec = pl.BlockSpec((pl.Squeezed(), n_segment, tc, thw),
                          lambda ci, si, b: (b, 0, ci, si))

    total = n_batch * n_segment * c * hw
    cost = pl.CostEstimate(flops=5 * total, transcendentals=0,
                           bytes_accessed=2 * total * itemsize)

    out = pl.pallas_call(
        tim_kernel,
        out_shape=jax.ShapeDtypeStruct((n_batch, n_segment, c_g, lane), x.dtype),
        grid=grid,
        in_specs=[w_spec, x_spec],
        out_specs=o_spec,
        compiler_params=pltpu.CompilerParams(
            dimension_semantics=("parallel", "parallel", "parallel"),
            vmem_limit_bytes=int(vmem_limit)),
        cost_estimate=cost,
    )(w_arr, xr)
    return out.reshape(nt, c, h, w)


def tim_ref(x, weight, n_segment):
    """Plain-JAX reference matching the PyTorch forward exactly."""
    nt, c, h, w = x.shape
    nb = nt // n_segment
    xr = x.reshape(nb, n_segment, c, h, w)
    xp = jnp.pad(xr, ((0, 0), (1, 1), (0, 0), (0, 0), (0, 0)))
    w0 = weight[:, 0, 0][None, None, :, None, None]
    w1 = weight[:, 0, 1][None, None, :, None, None]
    w2 = weight[:, 0, 2][None, None, :, None, None]
    out = w0 * xp[:, :-2] + w1 * xp[:, 1:-1] + w2 * xp[:, 2:]
    return out.reshape(nt, c, h, w)


def make_shift_weight(c, n_div=8, mode="shift"):
    """Deterministic init replicating TIM.__init__ ('shift' mode)."""
    fold = c // n_div
    wt = jnp.zeros((c, 1, 3), jnp.float32)
    if mode == "shift":
        wt = wt.at[:fold, 0, 2].set(1.0)           # first fold: take x[t+1]
        wt = wt.at[fold:2 * fold, 0, 0].set(1.0)   # next fold: take x[t-1]
        if 2 * fold < c:
            wt = wt.at[2 * fold:, 0, 1].set(1.0)   # rest: identity
    elif mode == "fixed":
        wt = wt.at[:, 0, 1].set(1.0)
    return wt


if __name__ == "__main__":
    key = jax.random.PRNGKey(0)

    # Case 1: lane-aligned spatial (16x16), f32, auto tiles + forced multi-tile grid.
    n_segment, n_batch, c, h = 8, 2, 16, 16
    nt = n_batch * n_segment
    x = jax.random.normal(key, (nt, c, h, h), dtype=jnp.float32)
    weight = make_shift_weight(c, n_div=8, mode="shift")
    ref = tim_ref(x, weight, n_segment)

    out = jax.block_until_ready(tim_forward(x, weight, n_segment))
    assert out.shape == (nt, c, h, h)
    assert jnp.allclose(out, ref, atol=1e-6), "Pallas TIM mismatch (auto tiles)"

    out_tiled = jax.block_until_ready(
        tim_forward(x, weight, n_segment, tile_c=8, tile_hw=128))
    assert jnp.allclose(out_tiled, ref, atol=1e-6), "Pallas TIM mismatch (forced tiles)"

    # Case 2: non-128-multiple spatial (14x14 -> hw=196) exercises the
    # channel->lane regrouping path (g=32), with dense ('norm'-style) taps.
    c2, h2 = 64, 14
    x2 = jax.random.normal(jax.random.PRNGKey(1), (nt, c2, h2, h2), dtype=jnp.float32)
    w2 = 0.1 * jax.random.normal(jax.random.PRNGKey(2), (c2, 1, 3), dtype=jnp.float32)
    ref2 = tim_ref(x2, w2, n_segment)
    out2 = jax.block_until_ready(tim_forward(x2, w2, n_segment))
    assert jnp.allclose(out2, ref2, atol=1e-5), "Pallas TIM mismatch (regrouped lanes)"

    # Case 3: bf16 activations (dtype-aware sublane alignment, f32 compute).
    xb = x.astype(jnp.bfloat16)
    outb = jax.block_until_ready(tim_forward(xb, weight, n_segment))
    refb = tim_ref(xb.astype(jnp.float32), weight, n_segment)
    assert outb.dtype == jnp.bfloat16
    assert jnp.allclose(outb.astype(jnp.float32), refb, atol=3e-2), \
        "Pallas TIM mismatch (bf16)"

    print("KERNEL_OK")
</pallas_src>

<mosaic_0001>
module attributes {stable_mosaic.version = 11 : i64} {
  func.func @tim_kernel(%arg0: i32, %arg1: i32, %arg2: i32, %arg3: memref<3x16x1xf32, #tpu.memory_space<vmem>>, %arg4: memref<1x8x16x256xf32, #tpu.memory_space<vmem>>, %arg5: memref<1x8x16x256xf32, #tpu.memory_space<vmem>>) attributes {dimension_semantics = [#tpu.dimension_semantics<parallel>, #tpu.dimension_semantics<parallel>, #tpu.dimension_semantics<parallel>], iteration_bounds = array<i64: 1, 1, 2>, scalar_prefetch = 0 : i64, scratch_operands = 0 : i64, tpu.core_type = #tpu.core_type<tc>, window_params = [{transform_indices = @transform_0, window_bounds = array<i64: 3, 16, 1>}, {transform_indices = @transform_1, window_bounds = array<i64: 1, 8, 16, 256>}, {transform_indices = @transform_2, window_bounds = array<i64: 1, 8, 16, 256>}]} {
    %c0 = arith.constant 0 : index
    %c0_0 = arith.constant 0 : index
    %c0_1 = arith.constant 0 : index
    %0 = vector.load %arg3[%c0, %c0_0, %c0_1] : memref<3x16x1xf32, #tpu.memory_space<vmem>>, vector<3x16x1xf32>
    %1 = vector.extract_strided_slice %0 {offsets = [0, 0, 0], sizes = [1, 16, 1], strides = [1, 1, 1]} : vector<3x16x1xf32> to vector<1x16x1xf32>
    %2 = vector.shape_cast %1 : vector<1x16x1xf32> to vector<16x1xf32>
    %3 = vector.extract_strided_slice %0 {offsets = [1, 0, 0], sizes = [1, 16, 1], strides = [1, 1, 1]} : vector<3x16x1xf32> to vector<1x16x1xf32>
    %4 = vector.shape_cast %3 : vector<1x16x1xf32> to vector<16x1xf32>
    %5 = vector.extract_strided_slice %0 {offsets = [2, 0, 0], sizes = [1, 16, 1], strides = [1, 1, 1]} : vector<3x16x1xf32> to vector<1x16x1xf32>
    %6 = vector.shape_cast %5 : vector<1x16x1xf32> to vector<16x1xf32>
    %c0_2 = arith.constant 0 : index
    %c0_3 = arith.constant 0 : index
    %c0_4 = arith.constant 0 : index
    %c0_5 = arith.constant 0 : index
    %7 = vector.load %arg4[%c0_2, %c0_3, %c0_4, %c0_5] : memref<1x8x16x256xf32, #tpu.memory_space<vmem>>, vector<1x8x16x256xf32>
    %8 = vector.shape_cast %7 : vector<1x8x16x256xf32> to vector<8x16x256xf32>
    %9 = vector.extract_strided_slice %8 {offsets = [0, 0, 0], sizes = [1, 16, 256], strides = [1, 1, 1]} : vector<8x16x256xf32> to vector<1x16x256xf32>
    %10 = vector.shape_cast %9 : vector<1x16x256xf32> to vector<16x256xf32>
    %11 = vector.broadcast %4 : vector<16x1xf32> to vector<16x256xf32>
    %12 = arith.mulf %11, %10 : vector<16x256xf32>
    %13 = vector.extract_strided_slice %8 {offsets = [1, 0, 0], sizes = [1, 16, 256], strides = [1, 1, 1]} : vector<8x16x256xf32> to vector<1x16x256xf32>
    %14 = vector.shape_cast %13 : vector<1x16x256xf32> to vector<16x256xf32>
    %15 = vector.broadcast %6 : vector<16x1xf32> to vector<16x256xf32>
    %16 = arith.mulf %15, %14 : vector<16x256xf32>
    %17 = arith.addf %12, %16 : vector<16x256xf32>
    %c0_6 = arith.constant 0 : index
    %c0_7 = arith.constant 0 : index
    %c0_8 = arith.constant 0 : index
    %c0_9 = arith.constant 0 : index
    %18 = vector.load %arg5[%c0_6, %c0_7, %c0_8, %c0_9] : memref<1x8x16x256xf32, #tpu.memory_space<vmem>>, vector<1x1x16x256xf32>
    %19 = vector.shape_cast %18 : vector<1x1x16x256xf32> to vector<16x256xf32>
    %20 = vector.shape_cast %17 : vector<16x256xf32> to vector<1x1x16x256xf32>
    tpu.vector_store %arg5[%c0_6, %c0_7, %c0_8, %c0_9], %20 {strides = array<i32>} : memref<1x8x16x256xf32, #tpu.memory_space<vmem>>, vector<1x1x16x256xf32>,
    %21 = vector.extract_strided_slice %8 {offsets = [0, 0, 0], sizes = [6, 16, 256], strides = [1, 1, 1]} : vector<8x16x256xf32> to vector<6x16x256xf32>
    %22 = vector.shape_cast %2 : vector<16x1xf32> to vector<1x16x1xf32>
    %23 = vector.broadcast %22 : vector<1x16x1xf32> to vector<6x16x256xf32>
    %24 = arith.mulf %23, %21 : vector<6x16x256xf32>
    %25 = vector.extract_strided_slice %8 {offsets = [1, 0, 0], sizes = [6, 16, 256], strides = [1, 1, 1]} : vector<8x16x256xf32> to vector<6x16x256xf32>
    %26 = vector.shape_cast %4 : vector<16x1xf32> to vector<1x16x1xf32>
    %27 = vector.broadcast %26 : vector<1x16x1xf32> to vector<6x16x256xf32>
    %28 = arith.mulf %27, %25 : vector<6x16x256xf32>
    %29 = arith.addf %24, %28 : vector<6x16x256xf32>
    %30 = vector.extract_strided_slice %8 {offsets = [2, 0, 0], sizes = [6, 16, 256], strides = [1, 1, 1]} : vector<8x16x256xf32> to vector<6x16x256xf32>
    %31 = vector.shape_cast %6 : vector<16x1xf32> to vector<1x16x1xf32>
    %32 = vector.broadcast %31 : vector<1x16x1xf32> to vector<6x16x256xf32>
    %33 = arith.mulf %32, %30 : vector<6x16x256xf32>
    %34 = arith.addf %29, %33 : vector<6x16x256xf32>
    %c0_10 = arith.constant 0 : index
    %c1 = arith.constant 1 : index
    %c0_11 = arith.constant 0 : index
    %c0_12 = arith.constant 0 : index
    %35 = vector.load %arg5[%c0_10, %c1, %c0_11, %c0_12] : memref<1x8x16x256xf32, #tpu.memory_space<vmem>>, vector<1x6x16x256xf32>
    %36 = vector.shape_cast %35 : vector<1x6x16x256xf32> to vector<6x16x256xf32>
    %37 = vector.shape_cast %34 : vector<6x16x256xf32> to vector<1x6x16x256xf32>
    tpu.vector_store %arg5[%c0_10, %c1, %c0_11, %c0_12], %37 {strides = array<i32>} : memref<1x8x16x256xf32, #tpu.memory_space<vmem>>, vector<1x6x16x256xf32>,
    %38 = vector.extract_strided_slice %8 {offsets = [6, 0, 0], sizes = [1, 16, 256], strides = [1, 1, 1]} : vector<8x16x256xf32> to vector<1x16x256xf32>
    %39 = vector.shape_cast %38 : vector<1x16x256xf32> to vector<16x256xf32>
    %40 = vector.broadcast %2 : vector<16x1xf32> to vector<16x256xf32>
    %41 = arith.mulf %40, %39 : vector<16x256xf32>
    %42 = vector.extract_strided_slice %8 {offsets = [7, 0, 0], sizes = [1, 16, 256], strides = [1, 1, 1]} : vector<8x16x256xf32> to vector<1x16x256xf32>
    %43 = vector.shape_cast %42 : vector<1x16x256xf32> to vector<16x256xf32>
    %44 = vector.broadcast %4 : vector<16x1xf32> to vector<16x256xf32>
    %45 = arith.mulf %44, %43 : vector<16x256xf32>
    %46 = arith.addf %41, %45 : vector<16x256xf32>
    %c0_13 = arith.constant 0 : index
    %c7 = arith.constant 7 : index
    %c0_14 = arith.constant 0 : index
    %c0_15 = arith.constant 0 : index
    %47 = vector.load %arg5[%c0_13, %c7, %c0_14, %c0_15] : memref<1x8x16x256xf32, #tpu.memory_space<vmem>>, vector<1x1x16x256xf32>
    %48 = vector.shape_cast %47 : vector<1x1x16x256xf32> to vector<16x256xf32>
    %49 = vector.shape_cast %46 : vector<16x256xf32> to vector<1x1x16x256xf32>
    tpu.vector_store %arg5[%c0_13, %c7, %c0_14, %c0_15], %49 {strides = array<i32>} : memref<1x8x16x256xf32, #tpu.memory_space<vmem>>, vector<1x1x16x256xf32>,
    return
  }
  func.func @transform_0(%arg0: i32, %arg1: i32, %arg2: i32) -> (i32, i32, i32) {
    %c0_i32 = arith.constant 0 : i32
    %c0_i32_0 = arith.constant 0 : i32
    %c0_i32_1 = arith.constant 0 : i32
    return %c0_i32, %arg0, %c0_i32_0 : i32, i32, i32
  }
  func.func @transform_1(%arg0: i32, %arg1: i32, %arg2: i32) -> (i32, i32, i32, i32) {
    %c0_i32 = arith.constant 0 : i32
    %c0_i32_0 = arith.constant 0 : i32
    return %arg2, %c0_i32, %arg0, %arg1 : i32, i32, i32, i32
  }
  func.func @transform_2(%arg0: i32, %arg1: i32, %arg2: i32) -> (i32, i32, i32, i32) {
    %c0_i32 = arith.constant 0 : i32
    %c0_i32_0 = arith.constant 0 : i32
    return %arg2, %c0_i32, %arg0, %arg1 : i32, i32, i32, i32
  }
}

</mosaic_0001>

<llo_original>
// kernel: tpu_custom_call.1
$region0: #{tpu_custom_call.1}
  #allocation0 [shape = 'u32[]', space=smem, size = 0x4, offset = 0x4, fixed_abs, tag = 'smem constant byte address 0x4 - core index']
  #allocation1 [shape = 'u32[144,128]{1,0:T(1,128)}', space=vmem, size = 0x12000, scoped, tag = 'internal scratch']
  %s0 = inlined_call_operand.vmem [shape: f32[3,16,1], index: 0, kind: input, shape index: {}]
  %s1 = inlined_call_operand.hbm [shape: f32[2,8,16,256], index: 1, kind: input, shape index: {}]
  %s2 = inlined_call_operand.hbm [shape: f32[2,8,16,256], index: 2, kind: output, shape index: {}]
  %s3 = sld [smem:[#allocation0]]
  $region45: #{tpu_custom_call.1} parent=0
    _
  %s5 = ssub.s32 1, %s3
  %s6 = scalar_select 0, %s5, %s3
  $region1: #{tpu_custom_call.1} parent=0
    #allocation2 [shape = 'u8[262144]{0}', space=vmem, size = 0x40000, scoped, tag = 'input window, operand 1']
    #allocation3 [shape = 's32[2]{0}', space=sflag, size = 0x8, scoped, tag = 'scoped memory for tpu_custom_call.1']
    #allocation4 [shape = 's32[2]{0}', space=sflag, size = 0x8, scoped, tag = 'scoped memory for tpu_custom_call.1']
    #allocation5 [shape = 'u8[262144]{0}', space=vmem, size = 0x40000, scoped, tag = 'output window, operand 0']
    %7 = vsyncpa [#allocation3], 0
    %s8 = scalar_lea.sflag [#allocation3], 1
    %9 = vsyncpa %s8, 0
    %10 = vsyncpa [#allocation4], 0
    %s11 = scalar_lea.sflag [#allocation4], 1
    %12 = vsyncpa %s11, 0
    loop: start=0, step=1, limit=4
    $region2: #{tpu_custom_call.1} parent=1 // loop_pre_header
      _
    $region3: #{tpu_custom_call.1} parent=1 // loop_header
      %s14 = sphi 0, %s18
      %p15 = scmp.ge.s32.totalorder %s14, 4
      %s21 = sphi 0, %s40
      %s22 = sphi 0, %s36
      %s23 = sphi 0, %s32
      %s24 = sphi 0, %s21
      %s25 = sphi 0, %s22
      %s26 = sphi 0, %s23
      %s27 = sphi 0, %s24
      %s28 = sphi 0, %s25
      %s29 = sphi 0, %s26
      %s43 = sphi 0, %s45
      %s46 = sphi 0, %s43
      %s47 = sphi 0, %s46
      %s63 = sphi 0, %s47
      %s73 = sphi 0, %s75
      %s76 = sphi 0, %s73
      %s77 = sphi 0, %s76
      %s93 = sphi 0, %s77
      %s103 = sphi 0, %s105
      %s106 = sphi 0, %s103
      %s107 = sphi 0, %s106
      %s123 = sphi 0, %s107
    $region4: #{tpu_custom_call.1} parent=1 // loop_header_branch
      %17 = sbr.rel (%p15) target = $region8
    $region5: #{tpu_custom_call.1} parent=1 // loop_body
      %s19 = ssub.s32 %s14, 1
      %s20 = ssub.s32 %s14, 2
      %s30 = sadd.s32 1, %s23
      %p31 = scmp.ge.s32.totalorder %s30, 2
      %s32 = scalar_select %p31, 0, %s30
      %s33 = sadd.s32 1, %s22
      %s34 = scalar_select %p31, %s33, %s22
      %p35 = scmp.ge.s32.totalorder %s34, 1
      %s36 = scalar_select %p35, 0, %s34
      %s37 = sadd.s32 1, %s21
      %s38 = scalar_select %p35, %s37, %s21
      %p39 = scmp.ge.s32.totalorder %s38, 1
      %s40 = scalar_select %p39, 0, %s38
      %s41 = ssub.s32 %s21, %s40
      %p42 = scmp.eq.s32.totalorder %s41, 0
      %s44 = sadd.s32 %s43, 1
      %s45 = scalar_select %p42, %s43, %s44
      %p48 = pneg %p42
      %p49 = scmp.eq.s32.totalorder %s14, 1
      %p50 = por %p48, %p49
      %p51 = scmp.ne.s32.totalorder %s43, %s46
      %p52 = scmp.eq.s32.totalorder %s14, 0
      %p53 = por %p51, %p52
      %p54 = scmp.ne.s32.totalorder %s43, %s46
      %p55 = scmp.eq.s32.totalorder %s19, 1
      %p56 = por %p54, %p55
      %p57 = scmp.ne.s32.totalorder %s46, %s47
      %p58 = scmp.eq.s32.totalorder %s19, 0
      %p59 = por %p57, %p58
      %p60 = scmp.ne.s32.totalorder %s46, %s47
      %p61 = scmp.eq.s32.totalorder %s20, 1
      %p62 = por %p60, %p61
      %p64 = scmp.ne.s32.totalorder %s47, %s63
      %p65 = scmp.eq.s32.totalorder %s20, 0
      %p66 = por %p64, %p65
      %s67 = ssub.s32 %s23, %s32
      %s68 = ssub.s32 %s21, %s40
      %s69 = sor.u32 %s67, %s68
      %s70 = ssub.s32 %s22, %s36
      %s71 = sor.u32 %s69, %s70
      %p72 = scmp.eq.s32.totalorder %s71, 0
      %s74 = sadd.s32 %s73, 1
      %s75 = scalar_select %p72, %s73, %s74
      %p78 = pneg %p72
      %p79 = scmp.eq.s32.totalorder %s14, 1
      %p80 = por %p78, %p79
      %p81 = scmp.ne.s32.totalorder %s73, %s76
      %p82 = scmp.eq.s32.totalorder %s14, 0
      %p83 = por %p81, %p82
      %p84 = scmp.ne.s32.totalorder %s73, %s76
      %p85 = scmp.eq.s32.totalorder %s19, 1
      %p86 = por %p84, %p85
      %p87 = scmp.ne.s32.totalorder %s76, %s77
      %p88 = scmp.eq.s32.totalorder %s19, 0
      %p89 = por %p87, %p88
      %p90 = scmp.ne.s32.totalorder %s76, %s77
      %p91 = scmp.eq.s32.totalorder %s20, 1
      %p92 = por %p90, %p91
      %p94 = scmp.ne.s32.totalorder %s77, %s93
      %p95 = scmp.eq.s32.totalorder %s20, 0
      %p96 = por %p94, %p95
      %s97 = ssub.s32 %s23, %s32
      %s98 = ssub.s32 %s21, %s40
      %s99 = sor.u32 %s97, %s98
      %s100 = ssub.s32 %s22, %s36
      %s101 = sor.u32 %s99, %s100
      %p102 = scmp.eq.s32.totalorder %s101, 0
      %s104 = sadd.s32 %s103, 1
      %s105 = scalar_select %p102, %s103, %s104
      %p108 = pneg %p102
      %p109 = scmp.eq.s32.totalorder %s14, 1
      %p110 = por %p108, %p109
      %p111 = scmp.ne.s32.totalorder %s103, %s106
      %p112 = scmp.eq.s32.totalorder %s14, 0
      %p113 = por %p111, %p112
      %p114 = scmp.ne.s32.totalorder %s103, %s106
      %p115 = scmp.eq.s32.totalorder %s19, 1
      %p116 = por %p114, %p115
      %p117 = scmp.ne.s32.totalorder %s106, %s107
      %p118 = scmp.eq.s32.totalorder %s19, 0
      %p119 = por %p117, %p118
      %p120 = scmp.ne.s32.totalorder %s106, %s107
      %p121 = scmp.eq.s32.totalorder %s20, 1
      %p122 = por %p120, %p121
      %p124 = scmp.ne.s32.totalorder %s107, %s123
      %p125 = scmp.eq.s32.totalorder %s20, 0
      %p126 = por %p124, %p125
      %p127 = scmp.le.s32.totalorder 1, %s14
      %p128 = scmp.lt.s32.totalorder %s14, 3
      %p129 = pnand %p127, %p128
      %p130 = pneg %p129
      // Predicated region
      $region9: #{tpu_custom_call.1} parent=5 // pred_check
        _
      $region10: #{tpu_custom_call.1} parent=5 // pred_check_branch
        %132 = sbr.rel (%p129) target = $region12
      $region11: #{tpu_custom_call.1} parent=5 // pred_region
        %s133 = ssub.s32 %s14, 1
        // Predicated region
        $region13: #{tpu_custom_call.1} parent=11 // pred_check
          %p134 = pneg %p59
        $region14: #{tpu_custom_call.1} parent=11 // pred_check_branch
          %136 = sbr.rel (%p134) target = $region16
        $region15: #{tpu_custom_call.1} parent=11 // pred_region
          %s137 = smul.u32 2, %s24
          %p138 = scmp.lt.s32.totalorder %s137, 1
          %s139 = scalar_select %p138, %s137, 1
          %s140 = smul.addr %s139, 8
          %s141 = scalar_lea.vmem %s0, %s140
          %s142 = smul.u32 2, %s24
        $region16: #{tpu_custom_call.1} parent=11 // pred_fallthru
          _
      $region12: #{tpu_custom_call.1} parent=5 // pred_fallthru
        _
      %p143 = scmp.lt.s32.totalorder %s14, 2
      // Predicated region
      $region17: #{tpu_custom_call.1} parent=5 // pred_check
        %p144 = pneg %p143
      $region18: #{tpu_custom_call.1} parent=5 // pred_check_branch
        %146 = sbr.rel (%p144) target = $region20
      $region19: #{tpu_custom_call.1} parent=5 // pred_region
        // Predicated region
        $region21: #{tpu_custom_call.1} parent=19 // pred_check
          %p147 = pneg %p83
        $region22: #{tpu_custom_call.1} parent=19 // pred_check_branch
          %149 = sbr.rel (%p147) target = $region24
        $region23: #{tpu_custom_call.1} parent=19 // pred_region
          %s150 = sand.u32 %s73, 1
          %s151 = scalar_lea.sflag [#allocation3], %s150
          %s152 = sand.u32 %s73, 1
          %s153 = smul.addr %s152, 256
          %s154 = scalar_lea.vmem [#allocation2], %s153
          %s155 = smul.u32 2, %s21
          %s156 = smul.u32 2, %s22
          %s158 = ssub.s32 4096, 4096
          %159 = vsyncadd %s151, %s158
          %s160 = smul.addr %s155, 2
          %s161 = sadd.s32 %s156, %s160
          %s162 = smul.addr %s23, 32
          %s163 = sadd.s32 %s161, %s162
          %s164 = smul.addr %s163, 128
          %s165 = scalar_lea.hbm %s1, %s164
          %s166 = sshll.u32 %s154, 4
          %s167 = int_to_ptr.vmem [resolvable:$true] %s166
          %172 = dma.hbm_to_vmem [thread:$0]  %s165, 4096, %s167, %s151, 256, 256, 16
        $region24: #{tpu_custom_call.1} parent=19 // pred_fallthru
          _
      $region20: #{tpu_custom_call.1} parent=5 // pred_fallthru
        _
      %p173 = scmp.le.s32.totalorder 1, %s14
      %p174 = scmp.lt.s32.totalorder %s14, 3
      %p175 = pnand %p173, %p174
      %p176 = pneg %p175
      // Predicated region
      $region25: #{tpu_custom_call.1} parent=5 // pred_check
        _
      $region26: #{tpu_custom_call.1} parent=5 // pred_check_branch
        %178 = sbr.rel (%p175) target = $region28
      $region27: #{tpu_custom_call.1} parent=5 // pred_region
        %s179 = ssub.s32 %s14, 1
        %s180 = sand.u32 %s76, 1
        %s181 = scalar_lea.sflag [#allocation3], %s180
        %s182 = sand.u32 %s76, 1
        %s183 = smul.addr %s182, 256
        %s184 = scalar_lea.vmem [#allocation2], %s183
        // Predicated region
        $region29: #{tpu_custom_call.1} parent=27 // pred_check
          %p185 = pneg %p89
        $region30: #{tpu_custom_call.1} parent=27 // pred_check_branch
          %187 = sbr.rel (%p185) target = $region32
        $region31: #{tpu_custom_call.1} parent=27 // pred_region
          %188 = dma.done %s181, 4096
        $region32: #{tpu_custom_call.1} parent=27 // pred_fallthru
          _
        %s189 = smul.u32 2, %s24
        %p190 = scmp.lt.s32.totalorder %s189, 1
        %s191 = scalar_select %p190, %s189, 1
        %s192 = smul.addr %s191, 8
        %s193 = scalar_lea.vmem %s0, %s192
        %p194 = pneg %p59
        %p195 = pneg %p56
        %s196 = sand.u32 %s76, 1
        %s197 = scalar_lea.sflag [#allocation3], %s196
        %s198 = sand.u32 %s76, 1
        %s199 = smul.addr %s198, 256
        %s200 = scalar_lea.vmem [#allocation2], %s199
        %p201 = pneg %p89
        %p202 = pneg %p86
        %p203 = pneg %p119
        %p204 = pneg %p116
        %s205 = sand.u32 %s106, 1
        %s206 = scalar_lea.sflag [#allocation4], %s205
        %s207 = sand.u32 %s106, 1
        %s208 = smul.addr %s207, 256
        %s209 = scalar_lea.vmem [#allocation5], %s208
        %s210 = smul.u32 2, %s24
        %p211 = scmp.lt.s32.totalorder %s210, 1
        %s212 = scalar_select %p211, %s210, 1
        %s213 = smul.addr %s212, 8
        %s214 = scalar_lea.vmem %s0, %s213
        %s215 = smul.u32 2, %s24
        %s216 = smul.u32 2, %s24
        %s217 = smul.u32 2, %s25
        %s218 = smul.u32 2, %s24
        %s219 = smul.u32 2, %s25
        %v220 = vld [vmem:[%s214] sm:$0xff]
        %v221 = vld [vmem:[%s214 + $0x8] sm:$0xff]
        %v222 = vld [vmem:[%s214 + $0x10] sm:$0xff]
        %v223 = vld [vmem:[%s214 + $0x18] sm:$0xff]
        %v224 = vld [vmem:[%s214 + $0x20] sm:$0xff]
        %v225 = vld [vmem:[%s214 + $0x28] sm:$0xff]
        %v226 = vld [vmem:[%s184] sm:$0xff]
        %v227 = vld [vmem:[%s184 + $0x8] sm:$0xff]
        %v228 = vld [vmem:[%s184 + $0x10] sm:$0xff]
        %v229 = vld [vmem:[%s184 + $0x18] sm:$0xff]
        %v230 = vld [vmem:[%s184 + $0x20] sm:$0xff]
        %v231 = vld [vmem:[%s184 + $0x28] sm:$0xff]
        %v232 = vld [vmem:[%s184 + $0x30] sm:$0xff]
        %v233 = vld [vmem:[%s184 + $0x38] sm:$0xff]
        %v234 = vld [vmem:[%s184 + $0x40] sm:$0xff]
        %v235 = vld [vmem:[%s184 + $0x48] sm:$0xff]
        %v236 = vld [vmem:[%s184 + $0x50] sm:$0xff]
        %v237 = vld [vmem:[%s184 + $0x58] sm:$0xff]
        %v238 = vld [vmem:[%s184 + $0x60] sm:$0xff]
        %v239 = vld [vmem:[%s184 + $0x68] sm:$0xff]
        %v240 = vld [vmem:[%s184 + $0x70] sm:$0xff]
        %v241 = vld [vmem:[%s184 + $0x78] sm:$0xff]
        %v242 = vld [vmem:[%s184 + $0x80] sm:$0xff]
        %v243 = vld [vmem:[%s184 + $0x88] sm:$0xff]
        %v244 = vld [vmem:[%s184 + $0x90] sm:$0xff]
        %v245 = vld [vmem:[%s184 + $0x98] sm:$0xff]
        %v246 = vld [vmem:[%s184 + $0xa0] sm:$0xff]
        %v247 = vld [vmem:[%s184 + $0xa8] sm:$0xff]
        %v248 = vld [vmem:[%s184 + $0xb0] sm:$0xff]
        %v249 = vld [vmem:[%s184 + $0xb8] sm:$0xff]
        %v250 = vld [vmem:[%s184 + $0xc0] sm:$0xff]
        %v251 = vld [vmem:[%s184 + $0xc8] sm:$0xff]
        %v252 = vld [vmem:[%s184 + $0xd0] sm:$0xff]
        %v253 = vld [vmem:[%s184 + $0xd8] sm:$0xff]
        %v254 = vld [vmem:[%s184 + $0xe0] sm:$0xff]
        %v255 = vld [vmem:[%s184 + $0xe8] sm:$0xff]
        %v256 = vld [vmem:[%s184 + $0xf0] sm:$0xff]
        %v257 = vld [vmem:[%s184 + $0xf8] sm:$0xff]
        %259 = vset.pattern.permute.xlu0 0
        %260 = vperm.xlu0 %259, %v222
        %v261 = vpop.permute.xlu0 %260
        %264 = vset.pattern.permute.xlu0 0
        %265 = vperm.xlu0 %264, %v223
        %v266 = vpop.permute.xlu0 %265
        %v268 = vmul.f32 %v261, %v226
        %v269 = vmul.f32 %v261, %v227
        %v270 = vmul.f32 %v266, %v228
        %v271 = vmul.f32 %v266, %v229
        %273 = vset.pattern.permute.xlu0 0
        %274 = vperm.xlu0 %273, %v224
        %v275 = vpop.permute.xlu0 %274
        %278 = vset.pattern.permute.xlu0 0
        %279 = vperm.xlu0 %278, %v225
        %v280 = vpop.permute.xlu0 %279
        %v282 = vmul.f32 %v275, %v230
        %v283 = vmul.f32 %v275, %v231
        %v284 = vmul.f32 %v280, %v232
        %v285 = vmul.f32 %v280, %v233
        %v286 = vadd.f32 %v268, %v282
        %v287 = vadd.f32 %v269, %v283
        %v288 = vadd.f32 %v270, %v284
        %v289 = vadd.f32 %v271, %v285
        %290 = vst [vmem:[%s209] sm:$0xff] %v286
        %291 = vst [vmem:[%s209 + $0x8] sm:$0xff] %v287
        %292 = vst [vmem:[%s209 + $0x10] sm:$0xff] %v288
        %293 = vst [vmem:[%s209 + $0x18] sm:$0xff] %v289
        %295 = vset.pattern.permute.xlu0 0
        %296 = vperm.xlu0 %295, %v220
        %v297 = vpop.permute.xlu0 %296
        %300 = vset.pattern.permute.xlu0 0
        %301 = vperm.xlu0 %300, %v221
        %v302 = vpop.permute.xlu0 %301
        %v304 = vmul.f32 %v297, %v226
        %v305 = vmul.f32 %v297, %v227
        %v306 = vmul.f32 %v302, %v228
        %v307 = vmul.f32 %v302, %v229
        %v308 = vmul.f32 %v297, %v230
        %v309 = vmul.f32 %v297, %v231
        %v310 = vmul.f32 %v302, %v232
        %v311 = vmul.f32 %v302, %v233
        %v312 = vmul.f32 %v297, %v234
        %v313 = vmul.f32 %v297, %v235
        %v314 = vmul.f32 %v302, %v236
        %v315 = vmul.f32 %v302, %v237
        %v316 = vmul.f32 %v297, %v238
        %v317 = vmul.f32 %v297, %v239
        %v318 = vmul.f32 %v302, %v240
        %v319 = vmul.f32 %v302, %v241
        %v320 = vmul.f32 %v297, %v242
        %v321 = vmul.f32 %v297, %v243
        %v322 = vmul.f32 %v302, %v244
        %v323 = vmul.f32 %v302, %v245
        %v324 = vmul.f32 %v297, %v246
        %v325 = vmul.f32 %v297, %v247
        %v326 = vmul.f32 %v302, %v248
        %v327 = vmul.f32 %v302, %v249
        %v328 = vmul.f32 %v261, %v230
        %v329 = vmul.f32 %v261, %v231
        %v330 = vmul.f32 %v266, %v232
        %v331 = vmul.f32 %v266, %v233
        %v332 = vmul.f32 %v261, %v234
        %v333 = vmul.f32 %v261, %v235
        %v334 = vmul.f32 %v266, %v236
        %v335 = vmul.f32 %v266, %v237
        %v336 = vmul.f32 %v261, %v238
        %v337 = vmul.f32 %v261, %v239
        %v338 = vmul.f32 %v266, %v240
        %v339 = vmul.f32 %v266, %v241
        %v340 = vmul.f32 %v261, %v242
        %v341 = vmul.f32 %v261, %v243
        %v342 = vmul.f32 %v266, %v244
        %v343 = vmul.f32 %v266, %v245
        %v344 = vmul.f32 %v261, %v246
        %v345 = vmul.f32 %v261, %v247
        %v346 = vmul.f32 %v266, %v248
        %v347 = vmul.f32 %v266, %v249
        %v348 = vmul.f32 %v261, %v250
        %v349 = vmul.f32 %v261, %v251
        %v350 = vmul.f32 %v266, %v252
        %v351 = vmul.f32 %v266, %v253
        %v352 = vadd.f32 %v304, %v328
        %v353 = vadd.f32 %v305, %v329
        %v354 = vadd.f32 %v306, %v330
        %v355 = vadd.f32 %v307, %v331
        %v356 = vadd.f32 %v308, %v332
        %v357 = vadd.f32 %v309, %v333
        %v358 = vadd.f32 %v310, %v334
        %v359 = vadd.f32 %v311, %v335
        %v360 = vadd.f32 %v312, %v336
        %v361 = vadd.f32 %v313, %v337
        %v362 = vadd.f32 %v314, %v338
        %v363 = vadd.f32 %v315, %v339
        %v364 = vadd.f32 %v316, %v340
        %v365 = vadd.f32 %v317, %v341
        %v366 = vadd.f32 %v318, %v342
        %v367 = vadd.f32 %v319, %v343
        %v368 = vadd.f32 %v320, %v344
        %v369 = vadd.f32 %v321, %v345
        %v370 = vadd.f32 %v322, %v346
        %v371 = vadd.f32 %v323, %v347
        %v372 = vadd.f32 %v324, %v348
        %v373 = vadd.f32 %v325, %v349
        %v374 = vadd.f32 %v326, %v350
        %v375 = vadd.f32 %v327, %v351
        %v376 = vmul.f32 %v275, %v234
        %v377 = vmul.f32 %v275, %v235
        %v378 = vmul.f32 %v280, %v236
        %v379 = vmul.f32 %v280, %v237
        %v380 = vmul.f32 %v275, %v238
        %v381 = vmul.f32 %v275, %v239
        %v382 = vmul.f32 %v280, %v240
        %v383 = vmul.f32 %v280, %v241
        %v384 = vmul.f32 %v275, %v242
        %v385 = vmul.f32 %v275, %v243
        %v386 = vmul.f32 %v280, %v244
        %v387 = vmul.f32 %v280, %v245
        %v388 = vmul.f32 %v275, %v246
        %v389 = vmul.f32 %v275, %v247
        %v390 = vmul.f32 %v280, %v248
        %v391 = vmul.f32 %v280, %v249
        %v392 = vmul.f32 %v275, %v250
        %v393 = vmul.f32 %v275, %v251
        %v394 = vmul.f32 %v280, %v252
        %v395 = vmul.f32 %v280, %v253
        %v396 = vmul.f32 %v275, %v254
        %v397 = vmul.f32 %v275, %v255
        %v398 = vmul.f32 %v280, %v256
        %v399 = vmul.f32 %v280, %v257
        %v400 = vadd.f32 %v352, %v376
        %v401 = vadd.f32 %v353, %v377
        %v402 = vadd.f32 %v354, %v378
        %v403 = vadd.f32 %v355, %v379
        %v404 = vadd.f32 %v356, %v380
        %v405 = vadd.f32 %v357, %v381
        %v406 = vadd.f32 %v358, %v382
        %v407 = vadd.f32 %v359, %v383
        %v408 = vadd.f32 %v360, %v384
        %v409 = vadd.f32 %v361, %v385
        %v410 = vadd.f32 %v362, %v386
        %v411 = vadd.f32 %v363, %v387
        %v412 = vadd.f32 %v364, %v388
        %v413 = vadd.f32 %v365, %v389
        %v414 = vadd.f32 %v366, %v390
        %v415 = vadd.f32 %v367, %v391
        %v416 = vadd.f32 %v368, %v392
        %v417 = vadd.f32 %v369, %v393
        %v418 = vadd.f32 %v370, %v394
        %v419 = vadd.f32 %v371, %v395
        %v420 = vadd.f32 %v372, %v396
        %v421 = vadd.f32 %v373, %v397
        %v422 = vadd.f32 %v374, %v398
        %v423 = vadd.f32 %v375, %v399
        %s424 = scalar_lea.vmem %s209, 32 [#allocation5]
        %425 = vst [vmem:[%s424] sm:$0xff] %v400
        %426 = vst [vmem:[%s424 + $0x8] sm:$0xff] %v401
        %427 = vst [vmem:[%s424 + $0x10] sm:$0xff] %v402
        %428 = vst [vmem:[%s424 + $0x18] sm:$0xff] %v403
        %429 = vst [vmem:[%s424 + $0x20] sm:$0xff] %v404
        %430 = vst [vmem:[%s424 + $0x28] sm:$0xff] %v405
        %431 = vst [vmem:[%s424 + $0x30] sm:$0xff] %v406
        %432 = vst [vmem:[%s424 + $0x38] sm:$0xff] %v407
        %433 = vst [vmem:[%s424 + $0x40] sm:$0xff] %v408
        %434 = vst [vmem:[%s424 + $0x48] sm:$0xff] %v409
        %435 = vst [vmem:[%s424 + $0x50] sm:$0xff] %v410
        %436 = vst [vmem:[%s424 + $0x58] sm:$0xff] %v411
        %437 = vst [vmem:[%s424 + $0x60] sm:$0xff] %v412
        %438 = vst [vmem:[%s424 + $0x68] sm:$0xff] %v413
        %439 = vst [vmem:[%s424 + $0x70] sm:$0xff] %v414
        %440 = vst [vmem:[%s424 + $0x78] sm:$0xff] %v415
        %441 = vst [vmem:[%s424 + $0x80] sm:$0xff] %v416
        %442 = vst [vmem:[%s424 + $0x88] sm:$0xff] %v417
        %443 = vst [vmem:[%s424 + $0x90] sm:$0xff] %v418
        %444 = vst [vmem:[%s424 + $0x98] sm:$0xff] %v419
        %445 = vst [vmem:[%s424 + $0xa0] sm:$0xff] %v420
        %446 = vst [vmem:[%s424 + $0xa8] sm:$0xff] %v421
        %447 = vst [vmem:[%s424 + $0xb0] sm:$0xff] %v422
        %448 = vst [vmem:[%s424 + $0xb8] sm:$0xff] %v423
        %v449 = vmul.f32 %v297, %v250
        %v450 = vmul.f32 %v297, %v251
        %v451 = vmul.f32 %v302, %v252
        %v452 = vmul.f32 %v302, %v253
        %v453 = vmul.f32 %v261, %v254
        %v454 = vmul.f32 %v261, %v255
        %v455 = vmul.f32 %v266, %v256
        %v456 = vmul.f32 %v266, %v257
        %v457 = vadd.f32 %v449, %v453
        %v458 = vadd.f32 %v450, %v454
        %v459 = vadd.f32 %v451, %v455
        %v460 = vadd.f32 %v452, %v456
        %s461 = scalar_lea.vmem %s209, 224 [#allocation5]
        %462 = vst [vmem:[%s461] sm:$0xff] %v457
        %463 = vst [vmem:[%s461 + $0x8] sm:$0xff] %v458
        %464 = vst [vmem:[%s461 + $0x10] sm:$0xff] %v459
        %465 = vst [vmem:[%s461 + $0x18] sm:$0xff] %v460
        %s466 = sand.u32 %s106, 1
        %s467 = scalar_lea.sflag [#allocation4], %s466
        %s468 = sand.u32 %s106, 1
        %s469 = smul.addr %s468, 256
        %s470 = scalar_lea.vmem [#allocation5], %s469
        // Predicated region
        $region33: #{tpu_custom_call.1} parent=27 // pred_check
          %p471 = pneg %p116
        $region34: #{tpu_custom_call.1} parent=27 // pred_check_branch
          %473 = sbr.rel (%p471) target = $region36
        $region35: #{tpu_custom_call.1} parent=27 // pred_region
          %s474 = smul.u32 2, %s24
          %s475 = smul.u32 2, %s25
          %s477 = ssub.s32 4096, 4096
          %478 = vsyncadd %s467, %s477
          %s479 = smul.addr %s474, 2
          %s480 = sadd.s32 %s475, %s479
          %s481 = smul.addr %s26, 32
          %s482 = sadd.s32 %s480, %s481
          %s483 = smul.addr %s482, 128
          %s484 = scalar_lea.hbm %s2, %s483
          %s485 = sshll.u32 %s470, 4
          %s486 = int_to_ptr.vmem [resolvable:$true] %s485
          %491 = dma.vmem_to_hbm [thread:$0]  %s486, 4096, %s484, %s467, 256, 256, 16
        $region36: #{tpu_custom_call.1} parent=27 // pred_fallthru
          _
      $region28: #{tpu_custom_call.1} parent=5 // pred_fallthru
        _
      %p492 = scmp.le.s32.totalorder 2, %s14
      // Predicated region
      $region37: #{tpu_custom_call.1} parent=5 // pred_check
        %p493 = pneg %p492
      $region38: #{tpu_custom_call.1} parent=5 // pred_check_branch
        %495 = sbr.rel (%p493) target = $region40
      $region39: #{tpu_custom_call.1} parent=5 // pred_region
        %s496 = ssub.s32 %s14, 2
        // Predicated region
        $region41: #{tpu_custom_call.1} parent=39 // pred_check
          %p497 = pneg %p122
        $region42: #{tpu_custom_call.1} parent=39 // pred_check_branch
          %499 = sbr.rel (%p497) target = $region44
        $region43: #{tpu_custom_call.1} parent=39 // pred_region
          %s500 = sand.u32 %s107, 1
          %s501 = scalar_lea.sflag [#allocation4], %s500
          %s502 = sand.u32 %s107, 1
          %s503 = smul.addr %s502, 256
          %s504 = scalar_lea.vmem [#allocation5], %s503
          %505 = dma.done %s501, 4096
        $region44: #{tpu_custom_call.1} parent=39 // pred_fallthru
          _
      $region40: #{tpu_custom_call.1} parent=5 // pred_fallthru
        _
    $region6: #{tpu_custom_call.1} parent=1 // loop_footer
      %s18 = sadd.s32 1, %s14
    $region7: #{tpu_custom_call.1} parent=1 // loop_footer_branch
      %13 = sbr.rel target = $region3
    $region8: #{tpu_custom_call.1} parent=1 // loop_exit
      _
    %506 = vsyncpa [#allocation3], 1
    %s507 = scalar_lea.sflag [#allocation3], 1
    %508 = vsyncpa %s507, 1
    %509 = vsyncpa [#allocation4], 1
    %s510 = scalar_lea.sflag [#allocation4], 1
    %511 = vsyncpa %s510, 1

</llo_original>
